<compile_context>
chip_gen: v5e
topology: v5e:2x2
jax: 0.10.0
libtpu: 0.0.40
codegen_flags: <defaults>
</compile_context>

<pallas_src>
import functools

import jax
import jax.numpy as jnp
from jax import lax
from jax.experimental import pallas as pl
from jax.experimental.pallas import tpu as pltpu


def _round_up(x, m):
    return (x + m - 1) // m * m


def _mlp_critic_kernel(x_ref, w1_ref, b1_ref, w2_ref, b2_ref, w3_ref, b3_ref,
                       out_ref, *, bf16_tanh):
    """Whole-network forward on one batch tile.

    x_ref : (TB, obs_dim)  batch-major obs tile (no wrapper transpose)
    w1    : (h1, obs_dim)  b1: (h1, 1)
    w2    : (h2, h1)       b2: (h2, 1)
    w3    : (h2, 1)        b3: (1, 1)
    out_ref: (1, TB)       lane-dense values for this tile.
    """
    x = x_ref[...]                                                    # (TB, obs_dim)

    def _tanh(z):
        if bf16_tanh:
            # v6e/v7x: EUP/VPU are bf16-capable -> halves EUP work on the
            # dominant tanh block.  Keep MXU accumulation + head in f32.
            return jnp.tanh(z.astype(jnp.bfloat16)).astype(jnp.float32)
        return jnp.tanh(z)

    # Layer 1: contract obs_dim (last dim of both) -> (h1, TB), no transpose copy.
    z1 = lax.dot_general(
        w1_ref[...], x,
        dimension_numbers=(((1,), (1,)), ((), ())),
        preferred_element_type=jnp.float32,
    ) + b1_ref[...]                                                   # (h1, TB)
    h1 = _tanh(z1)

    # Layer 2: (h2, h1) @ (h1, TB) -> (h2, TB)
    z2 = jnp.dot(w2_ref[...], h1, preferred_element_type=jnp.float32) + b2_ref[...]
    h2 = _tanh(z2)                                                    # (h2, TB)

    # Head (out_features = 1): VPU multiply + sublane reduce; already lane-dense.
    v = jnp.sum(h2 * w3_ref[...], axis=0, keepdims=True) + b3_ref[...]  # (1, TB)

    out_ref[...] = v.astype(out_ref.dtype)


def prepare_params(params):
    """One-time param prep (f32 casts + reshapes) in PyTorch nn.Linear layout.

    params: w1 (h1, obs_dim), b1 (h1,), w2 (h2, h1), b2 (h2,), w3 (1, h2), b3 (1,)
    """
    h1_dim = params["w1"].shape[0]
    h2_dim = params["w2"].shape[0]
    return {
        "w1": jnp.asarray(params["w1"], jnp.float32),
        "b1": jnp.asarray(params["b1"], jnp.float32).reshape(h1_dim, 1),
        "w2": jnp.asarray(params["w2"], jnp.float32),
        "b2": jnp.asarray(params["b2"], jnp.float32).reshape(h2_dim, 1),
        "w3": jnp.asarray(params["w3"], jnp.float32).reshape(h2_dim, 1),
        "b3": jnp.asarray(params["b3"], jnp.float32).reshape(1, 1),
    }


def _pick_tile(B):
    """Batch tile (lane count).  Always a multiple of 128; >=2 tiles for B>=~256
    so the grid splits across v7x's two TensorCores."""
    if B <= 256:
        return max(128, _round_up(B, 128))
    return min(2048, max(256, _round_up(pl.cdiv(B, 2), 128)))


def mlp_critic_forward(obs, prep, *, bf16_tanh=False):
    """obs: (B, obs_dim).  prep: output of prepare_params().
    Returns value estimates of shape (B,) — matches torch.squeeze(v_net(obs), -1)."""
    B, obs_dim = obs.shape
    if obs.dtype != jnp.float32:
        obs = obs.astype(jnp.float32)

    w1, b1 = prep["w1"], prep["b1"]
    w2, b2 = prep["w2"], prep["b2"]
    w3, b3 = prep["w3"], prep["b3"]
    h1_dim = w1.shape[0]
    h2_dim = w2.shape[0]

    TB = _pick_tile(B)
    grid = pl.cdiv(B, TB)
    n_out = grid * TB      # padded lane-dense output width; sliced back to B.
    # VMEM footprint: double-buffered (TB,obs_dim)+(1,TB) tiles + resident weights
    # << 1 MiB even at TB=2048 -> fits v5e/v6e (128 MiB) and v7x (64 MiB) easily.

    kernel = functools.partial(_mlp_critic_kernel, bf16_tanh=bf16_tanh)

    out = pl.pallas_call(
        kernel,
        out_shape=jax.ShapeDtypeStruct((1, n_out), jnp.float32),
        grid=(grid,),
        in_specs=[
            pl.BlockSpec((TB, obs_dim), lambda i: (i, 0)),        # obs tile (pipelined;
                                                                  # ragged tail handled by Pallas)
            pl.BlockSpec((h1_dim, obs_dim), lambda i: (0, 0)),    # weights stay resident
            pl.BlockSpec((h1_dim, 1), lambda i: (0, 0)),
            pl.BlockSpec((h2_dim, h1_dim), lambda i: (0, 0)),
            pl.BlockSpec((h2_dim, 1), lambda i: (0, 0)),
            pl.BlockSpec((h2_dim, 1), lambda i: (0, 0)),
            pl.BlockSpec((1, 1), lambda i: (0, 0)),
        ],
        out_specs=pl.BlockSpec((1, TB), lambda i: (0, i)),        # lane-dense values
        compiler_params=pltpu.CompilerParams(
            dimension_semantics=("parallel",)),
    )(obs, w1, b1, w2, b2, w3, b3)

    return out[0, :B]


def init_params(key, obs_dim, hidden_sizes):
    """Deterministic synthetic init in PyTorch nn.Linear layout/defaults."""
    sizes = [obs_dim] + list(hidden_sizes) + [1]
    params = {}
    for j in range(len(sizes) - 1):
        fan_in, fan_out = sizes[j], sizes[j + 1]
        key, kw, kb = jax.random.split(key, 3)
        bound = 1.0 / jnp.sqrt(jnp.float32(fan_in))
        w = jax.random.uniform(kw, (fan_out, fan_in), jnp.float32, -bound, bound)
        b = jax.random.uniform(kb, (fan_out,), jnp.float32, -bound, bound)
        params[f"w{j + 1}"] = w
        params[f"b{j + 1}"] = b
    return params


def _reference(obs, params):
    h = jnp.tanh(obs @ params["w1"].T + params["b1"])
    h = jnp.tanh(h @ params["w2"].T + params["b2"])
    return jnp.squeeze(h @ params["w3"].T + params["b3"], -1)


if __name__ == "__main__":
    key = jax.random.PRNGKey(0)

    obs_dim = 16
    hidden_sizes = (32, 32)   # activation = Tanh (typical SpinningUp default)

    key, k_params = jax.random.split(key)
    params = init_params(k_params, obs_dim, hidden_sizes)
    prep = prepare_params(params)   # one-time param prep (hoisted out of forward)

    # Small batch (single 128-lane tile, grid=1).
    batch = 8
    key, k_obs = jax.random.split(key)
    obs = jax.random.normal(k_obs, (batch, obs_dim), dtype=jnp.float32)
    v = jax.block_until_ready(mlp_critic_forward(obs, prep))
    v_ref = _reference(obs, params)
    assert v.shape == (batch,)
    assert jnp.allclose(v, v_ref, atol=1e-5, rtol=1e-5)

    # Larger batch: exercises the multi-tile grid (TB=384, grid=2) and the
    # ragged final block (no wrapper-side pad/transpose of obs).
    batch2 = 640
    key, k_obs2 = jax.random.split(key)
    obs2 = jax.random.normal(k_obs2, (batch2, obs_dim), dtype=jnp.float32)
    v2 = jax.block_until_ready(mlp_critic_forward(obs2, prep))
    v2_ref = _reference(obs2, params)
    assert v2.shape == (batch2,)
    assert jnp.allclose(v2, v2_ref, atol=1e-5, rtol=1e-5)

    # TODO(synk): enable bf16_tanh=True on v6e/v7x behind a relaxed-tolerance
    # check (EUP halving); kept off here so the 1e-5 f32 asserts hold on all gens.

    print("KERNEL_OK")
</pallas_src>

<mosaic_0001>
module attributes {stable_mosaic.version = 11 : i64} {
  func.func @_mlp_critic_kernel(%arg0: i32, %arg1: memref<128x16xf32, #tpu.memory_space<vmem>>, %arg2: memref<32x16xf32, #tpu.memory_space<vmem>>, %arg3: memref<32x1xf32, #tpu.memory_space<vmem>>, %arg4: memref<32x32xf32, #tpu.memory_space<vmem>>, %arg5: memref<32x1xf32, #tpu.memory_space<vmem>>, %arg6: memref<32x1xf32, #tpu.memory_space<vmem>>, %arg7: memref<1x1xf32, #tpu.memory_space<vmem>>, %arg8: memref<1x128xf32, #tpu.memory_space<vmem>>) attributes {dimension_semantics = [#tpu.dimension_semantics<parallel>], iteration_bounds = array<i64: 1>, scalar_prefetch = 0 : i64, scratch_operands = 0 : i64, tpu.core_type = #tpu.core_type<tc>, window_params = [{transform_indices = @transform_0, window_bounds = array<i64: 128, 16>}, {pipeline_mode = #tpu.pipeline_mode<synchronous>, transform_indices = @transform_1, window_bounds = array<i64: 32, 16>}, {pipeline_mode = #tpu.pipeline_mode<synchronous>, transform_indices = @transform_2, window_bounds = array<i64: 32, 1>}, {pipeline_mode = #tpu.pipeline_mode<synchronous>, transform_indices = @transform_3, window_bounds = array<i64: 32, 32>}, {pipeline_mode = #tpu.pipeline_mode<synchronous>, transform_indices = @transform_4, window_bounds = array<i64: 32, 1>}, {pipeline_mode = #tpu.pipeline_mode<synchronous>, transform_indices = @transform_5, window_bounds = array<i64: 32, 1>}, {pipeline_mode = #tpu.pipeline_mode<synchronous>, transform_indices = @transform_6, window_bounds = array<i64: 1, 1>}, {transform_indices = @transform_7, window_bounds = array<i64: 1, 128>}]} {
    %c0 = arith.constant 0 : index
    %c0_0 = arith.constant 0 : index
    %0 = vector.load %arg1[%c0, %c0_0] : memref<128x16xf32, #tpu.memory_space<vmem>>, vector<128x16xf32>
    %c0_1 = arith.constant 0 : index
    %c0_2 = arith.constant 0 : index
    %1 = vector.load %arg2[%c0_1, %c0_2] : memref<32x16xf32, #tpu.memory_space<vmem>>, vector<32x16xf32>
    %cst = arith.constant dense<0.000000e+00> : vector<32x128xf32>
    %2 = tpu.matmul %1, %0, %cst {dimension_numbers = #tpu.dot_dimension_numbers<[1], [1], [0], [0], [0, 0, 1, 0], [], []>} : vector<32x16xf32>, vector<128x16xf32>, vector<32x128xf32> -> vector<32x128xf32>
    %c0_3 = arith.constant 0 : index
    %c0_4 = arith.constant 0 : index
    %3 = vector.load %arg3[%c0_3, %c0_4] : memref<32x1xf32, #tpu.memory_space<vmem>>, vector<32x1xf32>
    %4 = vector.broadcast %3 : vector<32x1xf32> to vector<32x128xf32>
    %5 = arith.addf %2, %4 : vector<32x128xf32>
    %6 = math.tanh %5 : vector<32x128xf32>
    %c0_5 = arith.constant 0 : index
    %c0_6 = arith.constant 0 : index
    %7 = vector.load %arg4[%c0_5, %c0_6] : memref<32x32xf32, #tpu.memory_space<vmem>>, vector<32x32xf32>
    %cst_7 = arith.constant dense<0.000000e+00> : vector<32x128xf32>
    %8 = tpu.matmul %7, %6, %cst_7 {dimension_numbers = #tpu.dot_dimension_numbers<[1], [0], [0], [1], [0, 0, 1, 1], [], []>} : vector<32x32xf32>, vector<32x128xf32>, vector<32x128xf32> -> vector<32x128xf32>
    %c0_8 = arith.constant 0 : index
    %c0_9 = arith.constant 0 : index
    %9 = vector.load %arg5[%c0_8, %c0_9] : memref<32x1xf32, #tpu.memory_space<vmem>>, vector<32x1xf32>
    %10 = vector.broadcast %9 : vector<32x1xf32> to vector<32x128xf32>
    %11 = arith.addf %8, %10 : vector<32x128xf32>
    %12 = math.tanh %11 : vector<32x128xf32>
    %c0_10 = arith.constant 0 : index
    %c0_11 = arith.constant 0 : index
    %13 = vector.load %arg6[%c0_10, %c0_11] : memref<32x1xf32, #tpu.memory_space<vmem>>, vector<32x1xf32>
    %14 = vector.broadcast %13 : vector<32x1xf32> to vector<32x128xf32>
    %15 = arith.mulf %12, %14 : vector<32x128xf32>
    %cst_12 = arith.constant dense<0.000000e+00> : vector<128xf32>
    %16 = vector.multi_reduction <add>, %15, %cst_12 [0] : vector<32x128xf32> to vector<128xf32>
    %17 = vector.shape_cast %16 : vector<128xf32> to vector<1x128xf32>
    %c0_13 = arith.constant 0 : index
    %c0_14 = arith.constant 0 : index
    %18 = vector.load %arg7[%c0_13, %c0_14] : memref<1x1xf32, #tpu.memory_space<vmem>>, vector<1x1xf32>
    %19 = vector.broadcast %18 : vector<1x1xf32> to vector<1x128xf32>
    %20 = arith.addf %17, %19 : vector<1x128xf32>
    %c0_15 = arith.constant 0 : index
    %c0_16 = arith.constant 0 : index
    %21 = vector.load %arg8[%c0_15, %c0_16] : memref<1x128xf32, #tpu.memory_space<vmem>>, vector<1x128xf32>
    tpu.vector_store %arg8[%c0_15, %c0_16], %20 {strides = array<i32>} : memref<1x128xf32, #tpu.memory_space<vmem>>, vector<1x128xf32>,
    return
  }
  func.func @transform_0(%arg0: i32) -> (i32, i32) {
    %c0_i32 = arith.constant 0 : i32
    %c0_i32_0 = arith.constant 0 : i32
    return %arg0, %c0_i32 : i32, i32
  }
  func.func @transform_1(%arg0: i32) -> (i32, i32) {
    %c0_i32 = arith.constant 0 : i32
    %c0_i32_0 = arith.constant 0 : i32
    %c0_i32_1 = arith.constant 0 : i32
    return %c0_i32, %c0_i32_0 : i32, i32
  }
  func.func @transform_2(%arg0: i32) -> (i32, i32) {
    %c0_i32 = arith.constant 0 : i32
    %c0_i32_0 = arith.constant 0 : i32
    %c0_i32_1 = arith.constant 0 : i32
    return %c0_i32, %c0_i32_0 : i32, i32
  }
  func.func @transform_3(%arg0: i32) -> (i32, i32) {
    %c0_i32 = arith.constant 0 : i32
    %c0_i32_0 = arith.constant 0 : i32
    %c0_i32_1 = arith.constant 0 : i32
    return %c0_i32, %c0_i32_0 : i32, i32
  }
  func.func @transform_4(%arg0: i32) -> (i32, i32) {
    %c0_i32 = arith.constant 0 : i32
    %c0_i32_0 = arith.constant 0 : i32
    %c0_i32_1 = arith.constant 0 : i32
    return %c0_i32, %c0_i32_0 : i32, i32
  }
  func.func @transform_5(%arg0: i32) -> (i32, i32) {
    %c0_i32 = arith.constant 0 : i32
    %c0_i32_0 = arith.constant 0 : i32
    %c0_i32_1 = arith.constant 0 : i32
    return %c0_i32, %c0_i32_0 : i32, i32
  }
  func.func @transform_6(%arg0: i32) -> (i32, i32) {
    %c0_i32 = arith.constant 0 : i32
    %c0_i32_0 = arith.constant 0 : i32
    %c0_i32_1 = arith.constant 0 : i32
    return %c0_i32, %c0_i32_0 : i32, i32
  }
  func.func @transform_7(%arg0: i32) -> (i32, i32) {
    %c0_i32 = arith.constant 0 : i32
    %c0_i32_0 = arith.constant 0 : i32
    return %c0_i32, %arg0 : i32, i32
  }
}

</mosaic_0001>

<llo_original>
// kernel: tpu_custom_call.1
$region0: #{tpu_custom_call.1}
  #allocation0 [shape = 'u32[]', space=smem, size = 0x4, offset = 0x4, fixed_abs, tag = 'smem constant byte address 0x4 - core index']
  #allocation1 [shape = 'u32[72,128]{1,0:T(1,128)}', space=vmem, size = 0x9000, scoped, tag = 'internal scratch']
  #allocation2 [shape = 'f32[1,1]{1,0:T(1,128)S(1)}', space=vmem, size = 0x200, scoped, tag = 'scoped memory for tpu_custom_call.1']
  %s0 = inlined_call_operand.vmem [shape: f32[8,16], index: 0, kind: input, shape index: {}]
  %s1 = inlined_call_operand.vmem [shape: f32[32,16], index: 1, kind: input, shape index: {}]
  %s2 = inlined_call_operand.vmem [shape: f32[32,1], index: 2, kind: input, shape index: {}]
  %s3 = inlined_call_operand.vmem [shape: f32[32,32], index: 3, kind: input, shape index: {}]
  %s4 = inlined_call_operand.vmem [shape: f32[32,1], index: 4, kind: input, shape index: {}]
  %s5 = inlined_call_operand.vmem [shape: f32[32,1], index: 5, kind: input, shape index: {}]
  %s6 = inlined_call_operand.<no memory space> [shape: f32[1,1], index: 6, kind: input, shape index: {}]
  %s7 = inlined_call_operand.hbm [shape: f32[1,128], index: 7, kind: output, shape index: {}]
  %s8 = sld [smem:[#allocation0]]
  $region38: #{tpu_custom_call.1} parent=0
    _
  %s10 = ssub.s32 1, %s8
  %s11 = scalar_select 0, %s10, %s8
  %v12 = vstv %s6
  %13 = vst [vmem:[#allocation2] sm:$0x1] %v12
  $region1: #{tpu_custom_call.1} parent=0
    #allocation3 [shape = 'u8[512]{0}', space=vmem, size = 0x400, scoped, tag = 'output window, operand 0, single buffered']
    #allocation4 [shape = 's32[1]{0}', space=sflag, size = 0x4, scoped, tag = 'scoped memory for tpu_custom_call.1']
    %14 = vsyncpa [#allocation4], 0
    // Predicated region
    $region2: #{tpu_custom_call.1} parent=1 // pred_check
      _
    $region3: #{tpu_custom_call.1} parent=1 // pred_check_branch
      %16 = sbr.rel (0) target = $region5
    $region4: #{tpu_custom_call.1} parent=1 // pred_region
      _
    $region5: #{tpu_custom_call.1} parent=1 // pred_fallthru
      _
    // Predicated region
    $region6: #{tpu_custom_call.1} parent=1 // pred_check
      _
    $region7: #{tpu_custom_call.1} parent=1 // pred_check_branch
      %18 = sbr.rel (0) target = $region9
    $region8: #{tpu_custom_call.1} parent=1 // pred_region
      _
    $region9: #{tpu_custom_call.1} parent=1 // pred_fallthru
      _
    // Predicated region
    $region10: #{tpu_custom_call.1} parent=1 // pred_check
      _
    $region11: #{tpu_custom_call.1} parent=1 // pred_check_branch
      %20 = sbr.rel (0) target = $region13
    $region12: #{tpu_custom_call.1} parent=1 // pred_region
      _
    $region13: #{tpu_custom_call.1} parent=1 // pred_fallthru
      _
    // Predicated region
    $region14: #{tpu_custom_call.1} parent=1 // pred_check
      _
    $region15: #{tpu_custom_call.1} parent=1 // pred_check_branch
      %22 = sbr.rel (0) target = $region17
    $region16: #{tpu_custom_call.1} parent=1 // pred_region
      _
    $region17: #{tpu_custom_call.1} parent=1 // pred_fallthru
      _
    // Predicated region
    $region18: #{tpu_custom_call.1} parent=1 // pred_check
      _
    $region19: #{tpu_custom_call.1} parent=1 // pred_check_branch
      %24 = sbr.rel (0) target = $region21
    $region20: #{tpu_custom_call.1} parent=1 // pred_region
      _
    $region21: #{tpu_custom_call.1} parent=1 // pred_fallthru
      _
    // Predicated region
    $region22: #{tpu_custom_call.1} parent=1 // pred_check
      _
    $region23: #{tpu_custom_call.1} parent=1 // pred_check_branch
      %26 = sbr.rel (0) target = $region25
    $region24: #{tpu_custom_call.1} parent=1 // pred_region
      _
    $region25: #{tpu_custom_call.1} parent=1 // pred_fallthru
      _
    // Predicated region
    $region26: #{tpu_custom_call.1} parent=1 // pred_check
      _
    $region27: #{tpu_custom_call.1} parent=1 // pred_check_branch
      %28 = sbr.rel (0) target = $region29
    $region28: #{tpu_custom_call.1} parent=1 // pred_region
      _
    $region29: #{tpu_custom_call.1} parent=1 // pred_fallthru
      _
    %v29 = vld [vmem:[%s0] sm:$0xff]
    %v30 = vld [vmem:[%s0 + $0x8] sm:$0xff]
    %v31 = vld [vmem:[%s0 + $0x10] sm:$0xff]
    %v32 = vld [vmem:[%s0 + $0x18] sm:$0xff]
    %v33 = vld [vmem:[%s0 + $0x20] sm:$0xff]
    %v34 = vld [vmem:[%s0 + $0x28] sm:$0xff]
    %v35 = vld [vmem:[%s0 + $0x30] sm:$0xff]
    %v36 = vld [vmem:[%s0 + $0x38] sm:$0xff]
    %v37 = vld [vmem:[%s0 + $0x40] sm:$0xff]
    %v38 = vld [vmem:[%s0 + $0x48] sm:$0xff]
    %v39 = vld [vmem:[%s0 + $0x50] sm:$0xff]
    %v40 = vld [vmem:[%s0 + $0x58] sm:$0xff]
    %v41 = vld [vmem:[%s0 + $0x60] sm:$0xff]
    %v42 = vld [vmem:[%s0 + $0x68] sm:$0xff]
    %v43 = vld [vmem:[%s0 + $0x70] sm:$0xff]
    %v44 = vld [vmem:[%s0 + $0x78] sm:$0xff]
    %v45 = vld [vmem:[%s1] sm:$0xff]
    %v46 = vld [vmem:[%s1 + $0x8] sm:$0xff]
    %v47 = vld [vmem:[%s1 + $0x10] sm:$0xff]
    %v48 = vld [vmem:[%s1 + $0x18] sm:$0xff]
    %v49 = vld [vmem:[%s2] sm:$0xff]
    %v50 = vld [vmem:[%s2 + $0x8] sm:$0xff]
    %v51 = vld [vmem:[%s2 + $0x10] sm:$0xff]
    %v52 = vld [vmem:[%s2 + $0x18] sm:$0xff]
    %54 = vset.pattern.permute.xlu0 0
    %55 = vperm.xlu0 %54, %v49
    %v56 = vpop.permute.xlu0 %55
    %59 = vset.pattern.permute.xlu0 0
    %60 = vperm.xlu0 %59, %v50
    %v61 = vpop.permute.xlu0 %60
    %64 = vset.pattern.permute.xlu0 0
    %65 = vperm.xlu0 %64, %v51
    %v66 = vpop.permute.xlu0 %65
    %69 = vset.pattern.permute.xlu0 0
    %70 = vperm.xlu0 %69, %v52
    %v71 = vpop.permute.xlu0 %70
    %vm73 = vcmask 130048
    %v75 = vsel %vm73, %v45, 0
    %v78 = vsel %vm73, %v46, 0
    %v81 = vsel %vm73, %v47, 0
    %v84 = vsel %vm73, %v48, 0
    %v87 = vsel %vm73, %v29, 0
    %v90 = vsel %vm73, %v30, 0
    %v93 = vsel %vm73, %v31, 0
    %v96 = vsel %vm73, %v32, 0
    %v99 = vsel %vm73, %v33, 0
    %v102 = vsel %vm73, %v34, 0
    %v105 = vsel %vm73, %v35, 0
    %v108 = vsel %vm73, %v36, 0
    %v111 = vsel %vm73, %v37, 0
    %v114 = vsel %vm73, %v38, 0
    %v117 = vsel %vm73, %v39, 0
    %v120 = vsel %vm73, %v40, 0
    %v123 = vsel %vm73, %v41, 0
    %v126 = vsel %vm73, %v42, 0
    %v129 = vsel %vm73, %v43, 0
    %v132 = vsel %vm73, %v44, 0
    %134 = vmatpush.xpose.msra.mxu0 %v132
    %135 = vmatpush.xpose.msra.mxu0 %v129
    %136 = vmatpush.xpose.msra.mxu0 %v126
    %137 = vmatpush.xpose.msra.mxu0 %v123
    %138 = vmatpush.xpose.msra.mxu0 %v120
    %139 = vmatpush.xpose.msra.mxu0 %v117
    %140 = vmatpush.xpose.msra.mxu0 %v114
    %141 = vmatpush.xpose.msra.mxu0 %v111
    %142 = vmatpush.xpose.msra.mxu0 %v108
    %143 = vmatpush.xpose.msra.mxu0 %v105
    %144 = vmatpush.xpose.msra.mxu0 %v102
    %145 = vmatpush.xpose.msra.mxu0 %v99
    %146 = vmatpush.xpose.msra.mxu0 %v96
    %147 = vmatpush.xpose.msra.mxu0 %v93
    %148 = vmatpush.xpose.msra.mxu0 %v90
    %149 = vmatpush.xpose.msra.mxu0 %v87
    %150 = vmatmul.f32.gmra.mxu0 %v75
    %v151 = vpop.f32.mrf.mxu0
    %v152 = vadd.f32 %v56, %v151
    %153 = vmatmul.f32.gmra.mxu0 %v78
    %v154 = vpop.f32.mrf.mxu0
    %v155 = vadd.f32 %v61, %v154
    %156 = vmatmul.f32.gmra.mxu0 %v81
    %v157 = vpop.f32.mrf.mxu0
    %v158 = vadd.f32 %v66, %v157
    %159 = vmatmul.f32.gmra.mxu0 %v84
    %v160 = vpop.f32.mrf.mxu0
    %v161 = vadd.f32 %v71, %v160
    %162 = vdwg.mxu0
    %v163 = vtanh.pop %v152
    %v164 = vtanh.pop %v155
    %v165 = vtanh.pop %v158
    %v166 = vtanh.pop %v161
    %v167 = vld [vmem:[%s3] sm:$0xff]
    %v168 = vld [vmem:[%s3 + $0x8] sm:$0xff]
    %v169 = vld [vmem:[%s3 + $0x10] sm:$0xff]
    %v170 = vld [vmem:[%s3 + $0x18] sm:$0xff]
    %v171 = vld [vmem:[%s4] sm:$0xff]
    %v172 = vld [vmem:[%s4 + $0x8] sm:$0xff]
    %v173 = vld [vmem:[%s4 + $0x10] sm:$0xff]
    %v174 = vld [vmem:[%s4 + $0x18] sm:$0xff]
    %176 = vset.pattern.permute.xlu0 0
    %177 = vperm.xlu0 %176, %v171
    %v178 = vpop.permute.xlu0 %177
    %181 = vset.pattern.permute.xlu0 0
    %182 = vperm.xlu0 %181, %v172
    %v183 = vpop.permute.xlu0 %182
    %186 = vset.pattern.permute.xlu0 0
    %187 = vperm.xlu0 %186, %v173
    %v188 = vpop.permute.xlu0 %187
    %191 = vset.pattern.permute.xlu0 0
    %192 = vperm.xlu0 %191, %v174
    %v193 = vpop.permute.xlu0 %192
    %vm195 = vcmask 261120
    %v197 = vsel %vm195, %v167, 0
    %v200 = vsel %vm195, %v168, 0
    %v203 = vsel %vm195, %v169, 0
    %v206 = vsel %vm195, %v170, 0
    %208 = vmatpush.msra.mxu0 0.0
    %209 = vmatpush.msra.mxu0 0.0
    %210 = vmatpush.msra.mxu0 0.0
    %211 = vmatpush.msra.mxu0 0.0
    %212 = vmatpush.msra.mxu0 0.0
    %213 = vmatpush.msra.mxu0 0.0
    %214 = vmatpush.msra.mxu0 0.0
    %215 = vmatpush.msra.mxu0 0.0
    %216 = vmatpush.msra.mxu0 0.0
    %217 = vmatpush.msra.mxu0 0.0
    %218 = vmatpush.msra.mxu0 0.0
    %219 = vmatpush.msra.mxu0 0.0
    %220 = vmatpush.msra.mxu0 %v166
    %221 = vmatpush.msra.mxu0 %v165
    %222 = vmatpush.msra.mxu0 %v164
    %223 = vmatpush.msra.mxu0 %v163
    %224 = vmatmul.f32.gmra.mxu0 %v197
    %v225 = vpop.f32.mrf.mxu0
    %v226 = vadd.f32 %v178, %v225
    %227 = vmatmul.f32.gmra.mxu0 %v200
    %v228 = vpop.f32.mrf.mxu0
    %v229 = vadd.f32 %v183, %v228
    %230 = vmatmul.f32.gmra.mxu0 %v203
    %v231 = vpop.f32.mrf.mxu0
    %v232 = vadd.f32 %v188, %v231
    %233 = vmatmul.f32.gmra.mxu0 %v206
    %v234 = vpop.f32.mrf.mxu0
    %v235 = vadd.f32 %v193, %v234
    %236 = vdwg.mxu0
    %v237 = vtanh.pop %v226
    %v238 = vtanh.pop %v229
    %v239 = vtanh.pop %v232
    %v240 = vtanh.pop %v235
    %v241 = vld [vmem:[%s5] sm:$0xff]
    %v242 = vld [vmem:[%s5 + $0x8] sm:$0xff]
    %v243 = vld [vmem:[%s5 + $0x10] sm:$0xff]
    %v244 = vld [vmem:[%s5 + $0x18] sm:$0xff]
    %246 = vset.pattern.permute.xlu0 0
    %247 = vperm.xlu0 %246, %v241
    %v248 = vpop.permute.xlu0 %247
    %251 = vset.pattern.permute.xlu0 0
    %252 = vperm.xlu0 %251, %v242
    %v253 = vpop.permute.xlu0 %252
    %256 = vset.pattern.permute.xlu0 0
    %257 = vperm.xlu0 %256, %v243
    %v258 = vpop.permute.xlu0 %257
    %261 = vset.pattern.permute.xlu0 0
    %262 = vperm.xlu0 %261, %v244
    %v263 = vpop.permute.xlu0 %262
    %v265 = vmul.f32 %v237, %v248
    %v266 = vmul.f32 %v238, %v253
    %v267 = vmul.f32 %v239, %v258
    %v268 = vmul.f32 %v240, %v263
    %v269 = vadd.f32 %v265, %v266
    %v270 = vadd.f32 %v269, %v267
    %v271 = vadd.f32 %v270, %v268
    %v272 = vrot.slane %v271, 4
    %v273 = vadd.f32 %v271, %v272
    %v274 = vrot.slane %v273, 2
    %v275 = vadd.f32 %v273, %v274
    %v276 = vrot.slane %v275, 1
    %v277 = vadd.f32 %v275, %v276
    %v278 = vld [vmem:[#allocation2] sm:$0x1]
    %280 = vset.pattern.permute.xlu0 0
    %281 = vperm.xlu0 %280, %v278
    %v282 = vpop.permute.xlu0 %281
    %v284 = vperm.slane %v282, 0
    %v285 = vadd.f32 %v277, %v284
    %286 = vst [vmem:[#allocation3] sm:$0x1] %v285
    // Predicated region
    $region30: #{tpu_custom_call.1} parent=1 // pred_check
      _
    $region31: #{tpu_custom_call.1} parent=1 // pred_check_branch
      %288 = sbr.rel (0) target = $region33
    $region32: #{tpu_custom_call.1} parent=1 // pred_region
      %290 = vsyncadd [#allocation4], 0
      %s292 = sshll.u32 [#allocation3], 4
      %s293 = int_to_ptr.vmem [resolvable:$true] %s292
      %s294 = sshll.u32 %s7, 4
      %s295 = int_to_ptr.hbm [resolvable:$true] %s294
      %297 = dma.vmem_to_hbm [thread:$0]  %s293, 16, %s295, [#allocation4]
    $region33: #{tpu_custom_call.1} parent=1 // pred_fallthru
      _
    // Predicated region
    $region34: #{tpu_custom_call.1} parent=1 // pred_check
      _
    $region35: #{tpu_custom_call.1} parent=1 // pred_check_branch
      %299 = sbr.rel (0) target = $region37
    $region36: #{tpu_custom_call.1} parent=1 // pred_region
      %301 = dma.done [#allocation4], 16
    $region37: #{tpu_custom_call.1} parent=1 // pred_fallthru
      _
    %302 = vsyncpa [#allocation4], 1

</llo_original>
